<compile_context>
chip_gen: v6e
topology: v6e:2x2x1
jax: 0.10.0
libtpu: 0.0.40
codegen_flags: <defaults>
</compile_context>

<pallas_src>
import jax
import jax.numpy as jnp
from jax import lax
from jax.experimental import pallas as pl
from jax.experimental.pallas import tpu as pltpu

V_THRESHOLD = 1.0   # spikingjelly LIFNode defaults
V_RESET = 0.0


def _round_up(x, m):
    return int(pl.cdiv(x, m) * m)


def _fcs_kernel(x_ref, w_ref, thr_ref, o_ref):
    """Grid = (OUT tiles [parallel], K tiles [reduction, last]).

    x_ref:   (B, tk)   bf16  activation tile
    w_ref:   (tn, tk)  bf16  weight tile, PyTorch (OUT, IN) layout (no transpose)
    thr_ref: (1, tn)   f32   folded threshold row: tau*v_th - v_reset - bias
    o_ref:   (B, tn)   f32   resident across K; accumulator, then spikes
    """
    k = pl.program_id(1)

    @pl.when(k == 0)
    def _():
        o_ref[...] = jnp.zeros_like(o_ref)

    # Contract x's last dim against W's last dim: (B, tk) x (tn, tk) -> (B, tn).
    o_ref[...] += lax.dot_general(
        x_ref[...], w_ref[...],
        dimension_numbers=(((1,), (1,)), ((), ())),
        preferred_element_type=jnp.float32,
    )

    @pl.when(k == pl.num_programs(1) - 1)
    def _():
        # LIF charge from v0=0 + Heaviside fire, bias/tau/v_reset folded into thr.
        o_ref[...] = (o_ref[...] >= thr_ref[...]).astype(o_ref.dtype)
        # TODO(synk): TrainingHook / FA_wrapper alter only the backward pass
        # (DFA/sDFA/FA feedback); forward is identity, nothing more to emit.


def _choose_tiles(in_features, out_features, itemsize, weight_vmem_budget=8 << 20):
    """Pick (tn, tk): multiples of 256 where the shape allows, with the
    double-buffered weight tile (2 * tn * tk * itemsize) kept under ~8 MiB."""
    tn = min(_round_up(out_features, 128), 512)
    max_tk = max(256, (weight_vmem_budget // (2 * tn * itemsize)) // 256 * 256)
    tk = min(_round_up(in_features, 256), int(max_tk))
    return tn, tk


def fcs_block_vgg_forward(x, weight, bias, *, tau=2.0,
                          v_threshold=V_THRESHOLD, v_reset=V_RESET,
                          compute_dtype=jnp.bfloat16, tk=None, tn=None):
    """x: (B, IN), weight: (OUT, IN) (PyTorch layout, streamed untransposed),
    bias: (OUT,). Returns (B, OUT) f32 spikes."""
    B, IN = x.shape
    OUT, IN_w = weight.shape
    assert IN == IN_w and bias.shape == (OUT,)

    itemsize = jnp.dtype(compute_dtype).itemsize
    auto_tn, auto_tk = _choose_tiles(IN, OUT, itemsize)
    tn = auto_tn if tn is None else tn
    tk = auto_tk if tk is None else tk

    in_p = _round_up(IN, tk)
    out_p = _round_up(OUT, tn)

    # Stream activations/weights in bf16 (MXU-native, halves HBM traffic);
    # accumulation stays f32 inside the kernel.
    xc = x.astype(compute_dtype)
    wc = weight.astype(compute_dtype)
    if in_p != IN:        # zero-pad K: numerically exact for the matmul
        xc = jnp.pad(xc, ((0, 0), (0, in_p - IN)))
        wc = jnp.pad(wc, ((0, 0), (0, in_p - IN)))
    if out_p != OUT:      # padded OUT lanes are sliced off below
        wc = jnp.pad(wc, ((0, out_p - OUT), (0, 0)))

    # Folded epilogue: spike = (x@W.T >= tau*v_th - v_reset - bias).
    thr = (tau * v_threshold - v_reset) - bias.astype(jnp.float32)
    if out_p != OUT:
        thr = jnp.pad(thr, (0, out_p - OUT))
    thr = thr.reshape(1, out_p)

    grid = (out_p // tn, in_p // tk)

    out = pl.pallas_call(
        _fcs_kernel,
        out_shape=jax.ShapeDtypeStruct((B, out_p), jnp.float32),
        grid_spec=pltpu.PrefetchScalarGridSpec(
            num_scalar_prefetch=0,
            grid=grid,
            in_specs=[
                pl.BlockSpec((B, tk), lambda n, k: (0, k)),    # x tile
                # NOTE: if a profile shows exposed weight DMA on long K loops,
                # add pipeline_mode=pl.Buffered(3) on this spec only.
                pl.BlockSpec((tn, tk), lambda n, k: (n, k)),   # W tile (OUT, IN)
                pl.BlockSpec((1, tn), lambda n, k: (0, n)),    # threshold row
            ],
            out_specs=pl.BlockSpec((B, tn), lambda n, k: (0, n)),
        ),
        compiler_params=pltpu.CompilerParams(
            dimension_semantics=("parallel", "arbitrary"),
        ),
    )(xc, wc, thr)

    return out[:, :OUT] if out_p != OUT else out


def _reference_membrane(x, weight, bias, tau, compute_dtype, v_reset=V_RESET):
    xf = x.astype(compute_dtype).astype(jnp.float32)
    wf = weight.astype(compute_dtype).astype(jnp.float32)
    y = xf @ wf.T + bias
    return (y + v_reset) / tau


def _check(x, weight, bias, tau):
    out = jax.block_until_ready(fcs_block_vgg_forward(x, weight, bias, tau=tau))
    v = _reference_membrane(x, weight, bias, tau, jnp.bfloat16)
    ref = (v >= V_THRESHOLD).astype(jnp.float32)
    assert out.shape == ref.shape
    # Tiled f32 accumulation may reorder sums vs. XLA's reference; only demand
    # agreement away from the exact threshold (robustness, not a kernel bug).
    near = jnp.abs(v - V_THRESHOLD) <= 1e-3
    assert bool(jnp.all(jnp.where(near, True, out == ref)))
    return out


if __name__ == "__main__":
    TAU = 2.0
    key = jax.random.PRNGKey(0)
    k1, k2, k3, k4, k5, k6 = jax.random.split(key, 6)

    # Small FC shapes consistent with the module (flattened features -> hidden).
    B, IN, OUT = 8, 256, 128
    bound = float(IN) ** -0.5
    x = jax.random.normal(k1, (B, IN), dtype=jnp.float32)
    w = jax.random.uniform(k2, (OUT, IN), jnp.float32, -bound, bound)
    b = jax.random.uniform(k3, (OUT,), jnp.float32, -bound, bound)
    _check(x, w, b, TAU)

    # Ragged shapes to exercise the K / OUT zero-padding path.
    B2, IN2, OUT2 = 8, 200, 96
    bound2 = float(IN2) ** -0.5
    x2 = jax.random.normal(k4, (B2, IN2), dtype=jnp.float32)
    w2 = jax.random.uniform(k5, (OUT2, IN2), jnp.float32, -bound2, bound2)
    b2 = jax.random.uniform(k6, (OUT2,), jnp.float32, -bound2, bound2)
    _check(x2, w2, b2, TAU)

    print("KERNEL_OK")
</pallas_src>

<mosaic_0001>
module attributes {stable_mosaic.version = 11 : i64} {
  func.func @_fcs_kernel(%arg0: i32, %arg1: i32, %arg2: memref<8x256xbf16, #tpu.memory_space<vmem>>, %arg3: memref<128x256xbf16, #tpu.memory_space<vmem>>, %arg4: memref<1x128xf32, #tpu.memory_space<vmem>>, %arg5: memref<8x128xf32, #tpu.memory_space<vmem>>) attributes {dimension_semantics = [#tpu.dimension_semantics<parallel>, #tpu.dimension_semantics<arbitrary>], iteration_bounds = array<i64: 1, 1>, scalar_prefetch = 0 : i64, scratch_operands = 0 : i64, tpu.core_type = #tpu.core_type<tc>, window_params = [{transform_indices = @transform_0, window_bounds = array<i64: 8, 256>}, {transform_indices = @transform_1, window_bounds = array<i64: 128, 256>}, {transform_indices = @transform_2, window_bounds = array<i64: 1, 128>}, {transform_indices = @transform_3, window_bounds = array<i64: 8, 128>}]} {
    %c0_i32 = arith.constant 0 : i32
    %0 = arith.cmpi eq, %arg1, %c0_i32 : i32
    %1 = arith.extui %0 : i1 to i32
    %c0_i32_0 = arith.constant 0 : i32
    %2 = arith.cmpi ne, %1, %c0_i32_0 : i32
    scf.if %2 {
      %cst_10 = arith.constant 0.000000e+00 : f32
      %12 = vector.broadcast %cst_10 : f32 to vector<8x128xf32>
      %c0_11 = arith.constant 0 : index
      %c0_12 = arith.constant 0 : index
      %13 = vector.load %arg5[%c0_11, %c0_12] : memref<8x128xf32, #tpu.memory_space<vmem>>, vector<8x128xf32>
      tpu.vector_store %arg5[%c0_11, %c0_12], %12 {strides = array<i32>} : memref<8x128xf32, #tpu.memory_space<vmem>>, vector<8x128xf32>,
    } else {
    }
    %c0 = arith.constant 0 : index
    %c0_1 = arith.constant 0 : index
    %3 = vector.load %arg5[%c0, %c0_1] : memref<8x128xf32, #tpu.memory_space<vmem>>, vector<8x128xf32>
    %c0_2 = arith.constant 0 : index
    %c0_3 = arith.constant 0 : index
    %4 = vector.load %arg2[%c0_2, %c0_3] : memref<8x256xbf16, #tpu.memory_space<vmem>>, vector<8x256xbf16>
    %c0_4 = arith.constant 0 : index
    %c0_5 = arith.constant 0 : index
    %5 = vector.load %arg3[%c0_4, %c0_5] : memref<128x256xbf16, #tpu.memory_space<vmem>>, vector<128x256xbf16>
    %cst = arith.constant dense<0.000000e+00> : vector<8x128xf32>
    %6 = tpu.matmul %4, %5, %cst {dimension_numbers = #tpu.dot_dimension_numbers<[1], [1], [0], [0], [0, 0, 1, 0], [], []>} : vector<8x256xbf16>, vector<128x256xbf16>, vector<8x128xf32> -> vector<8x128xf32>
    %7 = arith.addf %3, %6 : vector<8x128xf32>
    %c0_6 = arith.constant 0 : index
    %c0_7 = arith.constant 0 : index
    %8 = vector.load %arg5[%c0_6, %c0_7] : memref<8x128xf32, #tpu.memory_space<vmem>>, vector<8x128xf32>
    tpu.vector_store %arg5[%c0_6, %c0_7], %7 {strides = array<i32>} : memref<8x128xf32, #tpu.memory_space<vmem>>, vector<8x128xf32>,
    %c0_i32_8 = arith.constant 0 : i32
    %9 = arith.cmpi eq, %arg1, %c0_i32_8 : i32
    %10 = arith.extui %9 : i1 to i32
    %c0_i32_9 = arith.constant 0 : i32
    %11 = arith.cmpi ne, %10, %c0_i32_9 : i32
    scf.if %11 {
      %c0_10 = arith.constant 0 : index
      %c0_11 = arith.constant 0 : index
      %12 = vector.load %arg5[%c0_10, %c0_11] : memref<8x128xf32, #tpu.memory_space<vmem>>, vector<8x128xf32>
      %c0_12 = arith.constant 0 : index
      %c0_13 = arith.constant 0 : index
      %13 = vector.load %arg4[%c0_12, %c0_13] : memref<1x128xf32, #tpu.memory_space<vmem>>, vector<1x128xf32>
      %14 = vector.broadcast %13 : vector<1x128xf32> to vector<8x128xf32>
      %15 = arith.cmpf oge, %12, %14 : vector<8x128xf32>
      %16 = arith.extui %15 : vector<8x128xi1> to vector<8x128xi32>
      %17 = arith.sitofp %16 : vector<8x128xi32> to vector<8x128xf32>
      %c0_14 = arith.constant 0 : index
      %c0_15 = arith.constant 0 : index
      %18 = vector.load %arg5[%c0_14, %c0_15] : memref<8x128xf32, #tpu.memory_space<vmem>>, vector<8x128xf32>
      tpu.vector_store %arg5[%c0_14, %c0_15], %17 {strides = array<i32>} : memref<8x128xf32, #tpu.memory_space<vmem>>, vector<8x128xf32>,
    } else {
    }
    return
  }
  func.func @transform_0(%arg0: i32, %arg1: i32) -> (i32, i32) {
    %c0_i32 = arith.constant 0 : i32
    %c0_i32_0 = arith.constant 0 : i32
    return %c0_i32, %arg1 : i32, i32
  }
  func.func @transform_1(%arg0: i32, %arg1: i32) -> (i32, i32) {
    %c0_i32 = arith.constant 0 : i32
    return %arg0, %arg1 : i32, i32
  }
  func.func @transform_2(%arg0: i32, %arg1: i32) -> (i32, i32) {
    %c0_i32 = arith.constant 0 : i32
    %c0_i32_0 = arith.constant 0 : i32
    return %c0_i32, %arg0 : i32, i32
  }
  func.func @transform_3(%arg0: i32, %arg1: i32) -> (i32, i32) {
    %c0_i32 = arith.constant 0 : i32
    %c0_i32_0 = arith.constant 0 : i32
    return %c0_i32, %arg0 : i32, i32
  }
}

</mosaic_0001>

<llo_original>
// kernel: tpu_custom_call.1
$region0: #{tpu_custom_call.1}
  #allocation0 [shape = 'u32[]', space=smem, size = 0x4, offset = 0x4, fixed_abs, tag = 'smem constant byte address 0x4 - core index']
  #allocation1 [shape = 'u32[144,128]{1,0:T(1,128)}', space=vmem, size = 0x12000, scoped, tag = 'internal scratch']
  %s0 = inlined_call_operand.hbm [shape: bf16[8,256], index: 0, kind: input, shape index: {}]
  %s1 = inlined_call_operand.hbm [shape: bf16[128,256], index: 1, kind: input, shape index: {}]
  %s2 = inlined_call_operand.vmem [shape: f32[1,128], index: 2, kind: input, shape index: {}]
  %s3 = inlined_call_operand.hbm [shape: f32[8,128], index: 3, kind: output, shape index: {}]
  %s4 = sld [smem:[#allocation0]]
  $region38: #{tpu_custom_call.1} parent=0
    _
  %s6 = ssub.s32 1, %s4
  %s7 = scalar_select 0, %s6, %s4
  $region1: #{tpu_custom_call.1} parent=0
    #allocation2 [shape = 'u8[4096]{0}', space=vmem, size = 0x1000, scoped, tag = 'input window, operand 0, single buffered']
    #allocation3 [shape = 's32[1]{0}', space=sflag, size = 0x4, scoped, tag = 'scoped memory for tpu_custom_call.1']
    #allocation4 [shape = 's32[1]{0}', space=sflag, size = 0x4, scoped, tag = 'scoped memory for tpu_custom_call.1']
    #allocation5 [shape = 'u8[65536]{0}', space=vmem, size = 0x10000, scoped, tag = 'input window, operand 1, single buffered']
    #allocation6 [shape = 's32[1]{0}', space=sflag, size = 0x4, scoped, tag = 'scoped memory for tpu_custom_call.1']
    #allocation7 [shape = 'u8[4096]{0}', space=vmem, size = 0x1000, scoped, tag = 'output window, operand 0, single buffered']
    %8 = vsyncpa [#allocation3], 0
    %9 = vsyncpa [#allocation6], 0
    %10 = vsyncpa [#allocation4], 0
    // Predicated region
    $region2: #{tpu_custom_call.1} parent=1 // pred_check
      _
    $region3: #{tpu_custom_call.1} parent=1 // pred_check_branch
      %12 = sbr.rel (0) target = $region5
    $region4: #{tpu_custom_call.1} parent=1 // pred_region
      %s14 = ssub.s32 128, 128
      %15 = vsyncadd [#allocation3], %s14
      %s17 = sshll.u32 [#allocation2], 4
      %s18 = int_to_ptr.vmem [resolvable:$true] %s17
      %20 = dma.hbm_to_vmem [thread:$0]  %s0, 128, %s18, [#allocation3]
    $region5: #{tpu_custom_call.1} parent=1 // pred_fallthru
      _
    // Predicated region
    $region6: #{tpu_custom_call.1} parent=1 // pred_check
      _
    $region7: #{tpu_custom_call.1} parent=1 // pred_check_branch
      %22 = sbr.rel (0) target = $region9
    $region8: #{tpu_custom_call.1} parent=1 // pred_region
      %s24 = ssub.s32 2048, 2048
      %25 = vsyncadd [#allocation6], %s24
      %s26 = sshll.u32 [#allocation5], 4
      %s27 = int_to_ptr.vmem [resolvable:$true] %s26
      %32 = dma.hbm_to_vmem [thread:$0]  %s1, 2048, %s27, [#allocation6], 128, 128, 8
    $region9: #{tpu_custom_call.1} parent=1 // pred_fallthru
      _
    // Predicated region
    $region10: #{tpu_custom_call.1} parent=1 // pred_check
      _
    $region11: #{tpu_custom_call.1} parent=1 // pred_check_branch
      %34 = sbr.rel (0) target = $region13
    $region12: #{tpu_custom_call.1} parent=1 // pred_region
      _
    $region13: #{tpu_custom_call.1} parent=1 // pred_fallthru
      _
    // Predicated region
    $region14: #{tpu_custom_call.1} parent=1 // pred_check
      _
    $region15: #{tpu_custom_call.1} parent=1 // pred_check_branch
      %36 = sbr.rel (0) target = $region17
    $region16: #{tpu_custom_call.1} parent=1 // pred_region
      %37 = dma.done [#allocation3], 128
    $region17: #{tpu_custom_call.1} parent=1 // pred_fallthru
      _
    // Predicated region
    $region18: #{tpu_custom_call.1} parent=1 // pred_check
      _
    $region19: #{tpu_custom_call.1} parent=1 // pred_check_branch
      %39 = sbr.rel (0) target = $region21
    $region20: #{tpu_custom_call.1} parent=1 // pred_region
      %40 = dma.done [#allocation6], 2048
    $region21: #{tpu_custom_call.1} parent=1 // pred_fallthru
      _
    %p42 = scmp.eq.s32.totalorder 0, 0
    // Predicated region
    $region22: #{tpu_custom_call.1} parent=1 // pred_check
      %p43 = pneg %p42
    $region23: #{tpu_custom_call.1} parent=1 // pred_check_branch
      %45 = sbr.rel (%p43) target = $region25
    $region24: #{tpu_custom_call.1} parent=1 // pred_region
      %46 = vst [vmem:[#allocation7] sm:$0xff] 0.0
    $region25: #{tpu_custom_call.1} parent=1 // pred_fallthru
      _
    %v47 = vld [vmem:[#allocation7] sm:$0xff]
    %v48 = vld [vmem:[#allocation2] sm:$0xff]
    %v49 = vld [vmem:[#allocation5] sm:$0xff]
    %v50 = vld [vmem:[#allocation5 + $0x8] sm:$0xff]
    %v51 = vld [vmem:[#allocation5 + $0x10] sm:$0xff]
    %v52 = vld [vmem:[#allocation5 + $0x18] sm:$0xff]
    %v53 = vld [vmem:[#allocation5 + $0x20] sm:$0xff]
    %v54 = vld [vmem:[#allocation5 + $0x28] sm:$0xff]
    %v55 = vld [vmem:[#allocation5 + $0x30] sm:$0xff]
    %v56 = vld [vmem:[#allocation5 + $0x38] sm:$0xff]
    %v57 = vld [vmem:[#allocation5 + $0x40] sm:$0xff]
    %v58 = vld [vmem:[#allocation5 + $0x48] sm:$0xff]
    %v59 = vld [vmem:[#allocation5 + $0x50] sm:$0xff]
    %v60 = vld [vmem:[#allocation5 + $0x58] sm:$0xff]
    %v61 = vld [vmem:[#allocation5 + $0x60] sm:$0xff]
    %v62 = vld [vmem:[#allocation5 + $0x68] sm:$0xff]
    %v63 = vld [vmem:[#allocation5 + $0x70] sm:$0xff]
    %v64 = vld [vmem:[#allocation5 + $0x78] sm:$0xff]
    %v66 = vunpack.c.l.b16 %v48
    %v67 = vunpack.c.h.b16 %v48
    %v68 = vpack.c.b16 %v66, %v66
    %v69 = vpack.c.b16 %v67, %v67
    %v88 = vunpack.c.l.b16 %v49
    %v89 = vunpack.c.h.b16 %v49
    %v90 = vunpack.c.l.b16 %v50
    %v91 = vunpack.c.h.b16 %v50
    %v92 = vunpack.c.l.b16 %v51
    %v93 = vunpack.c.h.b16 %v51
    %v94 = vunpack.c.l.b16 %v52
    %v95 = vunpack.c.h.b16 %v52
    %v96 = vunpack.c.l.b16 %v53
    %v97 = vunpack.c.h.b16 %v53
    %v98 = vunpack.c.l.b16 %v54
    %v99 = vunpack.c.h.b16 %v54
    %v100 = vunpack.c.l.b16 %v55
    %v101 = vunpack.c.h.b16 %v55
    %v102 = vunpack.c.l.b16 %v56
    %v103 = vunpack.c.h.b16 %v56
    %v104 = vunpack.c.l.b16 %v57
    %v105 = vunpack.c.h.b16 %v57
    %v106 = vunpack.c.l.b16 %v58
    %v107 = vunpack.c.h.b16 %v58
    %v108 = vunpack.c.l.b16 %v59
    %v109 = vunpack.c.h.b16 %v59
    %v110 = vunpack.c.l.b16 %v60
    %v111 = vunpack.c.h.b16 %v60
    %v112 = vunpack.c.l.b16 %v61
    %v113 = vunpack.c.h.b16 %v61
    %v114 = vunpack.c.l.b16 %v62
    %v115 = vunpack.c.h.b16 %v62
    %v116 = vunpack.c.l.b16 %v63
    %v117 = vunpack.c.h.b16 %v63
    %v118 = vunpack.c.l.b16 %v64
    %v119 = vunpack.c.h.b16 %v64
    %v120 = vpack.c.b16 %v90, %v88
    %v121 = vpack.c.b16 %v91, %v89
    %v122 = vpack.c.b16 %v94, %v92
    %v123 = vpack.c.b16 %v95, %v93
    %v124 = vpack.c.b16 %v98, %v96
    %v125 = vpack.c.b16 %v99, %v97
    %v126 = vpack.c.b16 %v102, %v100
    %v127 = vpack.c.b16 %v103, %v101
    %v128 = vpack.c.b16 %v106, %v104
    %v129 = vpack.c.b16 %v107, %v105
    %v130 = vpack.c.b16 %v110, %v108
    %v131 = vpack.c.b16 %v111, %v109
    %v132 = vpack.c.b16 %v114, %v112
    %v133 = vpack.c.b16 %v115, %v113
    %v134 = vpack.c.b16 %v118, %v116
    %v135 = vpack.c.b16 %v119, %v117
    %152 = vmatprep.subr.bf16.mxu0 %v135
    %153 = vmatpush1.bf16.xpose.msra.mxu0 %v134
    %154 = vmatprep.subr.bf16.mxu0 %v133
    %155 = vmatpush1.bf16.xpose.msra.mxu0 %v132
    %156 = vmatprep.subr.bf16.mxu0 %v131
    %157 = vmatpush1.bf16.xpose.msra.mxu0 %v130
    %158 = vmatprep.subr.bf16.mxu0 %v129
    %159 = vmatpush1.bf16.xpose.msra.mxu0 %v128
    %160 = vmatprep.subr.bf16.mxu0 %v127
    %161 = vmatpush1.bf16.xpose.msra.mxu0 %v126
    %162 = vmatprep.subr.bf16.mxu0 %v125
    %163 = vmatpush1.bf16.xpose.msra.mxu0 %v124
    %164 = vmatprep.subr.bf16.mxu0 %v123
    %165 = vmatpush1.bf16.xpose.msra.mxu0 %v122
    %166 = vmatprep.subr.bf16.mxu0 %v121
    %167 = vmatpush1.bf16.xpose.msra.mxu0 %v120
    %168 = vmatprep.subr.bf16.mxu0 0
    %169 = vmatpush2.bf16.xpose.msra.mxu0 0
    %170 = vmatprep.subr.bf16.mxu0 0
    %171 = vmatpush2.bf16.xpose.msra.mxu0 0
    %172 = vmatprep.subr.bf16.mxu0 0
    %173 = vmatpush2.bf16.xpose.msra.mxu0 0
    %174 = vmatprep.subr.bf16.mxu0 0
    %175 = vmatpush2.bf16.xpose.msra.mxu0 0
    %176 = vmatprep.subr.bf16.mxu0 0
    %177 = vmatpush2.bf16.xpose.msra.mxu0 0
    %178 = vmatprep.subr.bf16.mxu0 0
    %179 = vmatpush2.bf16.xpose.msra.mxu0 0
    %180 = vmatprep.subr.bf16.mxu0 0
    %181 = vmatpush2.bf16.xpose.msra.mxu0 0
    %182 = vmatprep.subr.bf16.mxu0 0
    %183 = vmatpush2.bf16.xpose.msra.mxu0 0
    %184 = vmatprep.mubr.bf16.mxu0 %v69
    %185 = vmatmul.mubr.bf16.gmra.mxu0 %v68
    %v186 = vpop.f32.mrf.mxu0
    %v187 = vadd.f32 0.0, %v186
    %v188 = vpop.f32.mrf.mxu0
    %v189 = vpop.f32.mrf.mxu0
    %v190 = vpop.f32.mrf.mxu0
    %191 = vdwg.mxu0
    %v192 = vadd.f32 %v47, %v187
    %193 = vst [vmem:[#allocation7] sm:$0xff] %v192
    // Predicated region
    $region26: #{tpu_custom_call.1} parent=1 // pred_check
      %p194 = pneg %p42
    $region27: #{tpu_custom_call.1} parent=1 // pred_check_branch
      %196 = sbr.rel (%p194) target = $region29
    $region28: #{tpu_custom_call.1} parent=1 // pred_region
      %v197 = vld [vmem:[#allocation7] sm:$0xff]
      %v198 = vld [vmem:[%s2] sm:$0x1]
      %v200 = vlaneseq
      %v201 = vshrl.u32 %v200, 7
      %v202 = vsub.s32 0, %v201
      %v203 = vrot.slane %v198, %v202
      %vm205 = vcmp.ge.f32.partialorder %v197, %v203
      %v206 = vsel %vm205, 1, 0
      %v207 = vcvt.s32.f32 %v206
      %208 = vst [vmem:[#allocation7] sm:$0xff] %v207
    $region29: #{tpu_custom_call.1} parent=1 // pred_fallthru
      _
    // Predicated region
    $region30: #{tpu_custom_call.1} parent=1 // pred_check
      _
    $region31: #{tpu_custom_call.1} parent=1 // pred_check_branch
      %210 = sbr.rel (0) target = $region33
    $region32: #{tpu_custom_call.1} parent=1 // pred_region
      %s212 = ssub.s32 128, 128
      %213 = vsyncadd [#allocation4], %s212
      %s215 = sshll.u32 [#allocation7], 4
      %s216 = int_to_ptr.vmem [resolvable:$true] %s215
      %218 = dma.vmem_to_hbm [thread:$0]  %s216, 128, %s3, [#allocation4]
    $region33: #{tpu_custom_call.1} parent=1 // pred_fallthru
      _
    // Predicated region
    $region34: #{tpu_custom_call.1} parent=1 // pred_check
      _
    $region35: #{tpu_custom_call.1} parent=1 // pred_check_branch
      %220 = sbr.rel (0) target = $region37
    $region36: #{tpu_custom_call.1} parent=1 // pred_region
      %221 = dma.done [#allocation4], 128
    $region37: #{tpu_custom_call.1} parent=1 // pred_fallthru
      _
    %222 = vsyncpa [#allocation3], 1
    %223 = vsyncpa [#allocation6], 1
    %224 = vsyncpa [#allocation4], 1

</llo_original>
